<compile_context>
chip_gen: v7x
topology: tpu7x:2x2x1
jax: 0.10.0
libtpu: 0.0.40
codegen_flags: <defaults>
</compile_context>

<pallas_src>
import functools

import jax
import jax.numpy as jnp
from jax.experimental import pallas as pl
from jax.experimental.pallas import tpu as pltpu


OBS_PAD = 128     # obs features padded to one full lane group
HIDDEN_PAD = 128  # hidden 64 -> 128
ACT_PAD = 128     # actions 4 -> 128 (lane-dense output store)


def _round_up(n, m):
    return ((n + m - 1) // m) * m


def mlp_kernel(x_ref, w1_ref, b1_ref, w2_ref, b2_ref, w3_ref, b3_ref, out_ref):
    """Fused Linear->ReLU->Linear->ReLU->Linear on one batch tile."""
    x = x_ref[...]                                                   # (TB, 128) bf16

    # Layer 1: bf16 matmul, f32 accumulate, f32 bias + ReLU.
    h1 = jnp.dot(x, w1_ref[...], preferred_element_type=jnp.float32)
    h1 = jnp.maximum(h1 + b1_ref[...], 0.0)                          # f32 ReLU

    # Layer 2.
    h2 = jnp.dot(h1.astype(jnp.bfloat16), w2_ref[...],
                 preferred_element_type=jnp.float32)
    h2 = jnp.maximum(h2 + b2_ref[...], 0.0)

    # Layer 3: Q-values (no activation), lane-dense (TB, 128) f32 store.
    q = jnp.dot(h2.astype(jnp.bfloat16), w3_ref[...],
                preferred_element_type=jnp.float32)
    out_ref[...] = (q + b3_ref[...]).astype(out_ref.dtype)


def pad_params(params):
    """Zero-pad nn.Linear-style (in,out) params to lane-dense shapes; weights -> bf16."""
    w1, b1, w2, b2, w3, b3 = params

    def pad_w(w, in_pad, out_pad):
        i, o = w.shape
        return jnp.pad(w, ((0, in_pad - i), (0, out_pad - o))).astype(jnp.bfloat16)

    def pad_b(b, out_pad):
        return jnp.pad(b, ((0, 0), (0, out_pad - b.shape[1]))).astype(jnp.float32)

    w1p = pad_w(w1, OBS_PAD, HIDDEN_PAD)        # (128, 128) bf16
    w2p = pad_w(w2, HIDDEN_PAD, HIDDEN_PAD)     # (128, 128) bf16
    w3p = pad_w(w3, HIDDEN_PAD, ACT_PAD)        # (128, 128) bf16
    b1p = pad_b(b1, HIDDEN_PAD)                 # (1, 128) f32
    b2p = pad_b(b2, HIDDEN_PAD)
    b3p = pad_b(b3, ACT_PAD)
    return (w1p, b1p, w2p, b2p, w3p, b3p)


def network_forward(x, padded_params, nb_actions, block_batch=None):
    """Pallas-backed equivalent of Network.forward: q_values = net(x)."""
    w1, b1, w2, b2, w3, b3 = padded_params
    batch, nb_obs = x.shape

    if block_batch is None:
        # Sublane-aligned tile; cap well under v7x's 64 MiB VMEM / 32 MiB scoped default.
        block_batch = min(512, _round_up(max(batch, 32), 32))
    padded_batch = _round_up(batch, block_batch)

    # Pad batch to a tile multiple and features to the lane-dense width; cast to bf16.
    xp = jnp.pad(x, ((0, padded_batch - batch), (0, OBS_PAD - nb_obs)))
    xp = xp.astype(jnp.bfloat16)

    grid = (padded_batch // block_batch,)

    out = pl.pallas_call(
        mlp_kernel,
        out_shape=jax.ShapeDtypeStruct((padded_batch, ACT_PAD), jnp.float32),
        grid=grid,
        in_specs=[
            # Activations: tiled over the batch grid axis.
            pl.BlockSpec((block_batch, OBS_PAD), lambda i: (i, 0)),
            # Weights/biases: constant index_map -> DMA'd once, VMEM-resident.
            pl.BlockSpec((OBS_PAD, HIDDEN_PAD), lambda i: (0, 0)),
            pl.BlockSpec((1, HIDDEN_PAD), lambda i: (0, 0)),
            pl.BlockSpec((HIDDEN_PAD, HIDDEN_PAD), lambda i: (0, 0)),
            pl.BlockSpec((1, HIDDEN_PAD), lambda i: (0, 0)),
            pl.BlockSpec((HIDDEN_PAD, ACT_PAD), lambda i: (0, 0)),
            pl.BlockSpec((1, ACT_PAD), lambda i: (0, 0)),
        ],
        out_specs=pl.BlockSpec((block_batch, ACT_PAD), lambda i: (i, 0)),
        compiler_params=pltpu.CompilerParams(
            dimension_semantics=("parallel",)),
    )(xp, w1, b1, w2, b2, w3, b3)

    # Drop batch/action padding (padded action lanes are exactly 0; sliced off
    # before any argmax so they can never be selected).
    return out[:batch, :nb_actions]


def init_params(key, nb_obs, nb_neurons, nb_actions):
    """Deterministic init mimicking nn.Linear (weights stored transposed: (in, out))."""
    k1, k2, k3, k4, k5, k6 = jax.random.split(key, 6)

    def linear_init(kw, kb, fan_in, fan_out):
        bound = 1.0 / jnp.sqrt(jnp.float32(fan_in))
        w = jax.random.uniform(kw, (fan_in, fan_out), jnp.float32, -bound, bound)
        b = jax.random.uniform(kb, (1, fan_out), jnp.float32, -bound, bound)
        return w, b

    w1, b1 = linear_init(k1, k2, nb_obs, nb_neurons)
    w2, b2 = linear_init(k3, k4, nb_neurons, nb_neurons)
    w3, b3 = linear_init(k5, k6, nb_neurons, nb_actions)
    return (w1, b1, w2, b2, w3, b3)


def reference_forward_f32(x, params):
    w1, b1, w2, b2, w3, b3 = params
    h1 = jnp.maximum(x @ w1 + b1, 0.0)
    h2 = jnp.maximum(h1 @ w2 + b2, 0.0)
    return h2 @ w3 + b3


def reference_forward_bf16(x, params):
    """Same precision path as the kernel: bf16 matmuls, f32 accumulate, f32 bias/ReLU."""
    w1, b1, w2, b2, w3, b3 = params
    bf = jnp.bfloat16
    h1 = jnp.maximum(
        jnp.dot(x.astype(bf), w1.astype(bf), preferred_element_type=jnp.float32) + b1, 0.0)
    h2 = jnp.maximum(
        jnp.dot(h1.astype(bf), w2.astype(bf), preferred_element_type=jnp.float32) + b2, 0.0)
    return jnp.dot(h2.astype(bf), w3.astype(bf), preferred_element_type=jnp.float32) + b3


if __name__ == "__main__":
    # LunarLander-v2: observation_space.shape = (8,), action_space.n = 4
    nb_obs, nb_neurons, nb_actions = 8, 64, 4

    key = jax.random.PRNGKey(0)
    key_params, key_x1, key_x2 = jax.random.split(key, 3)

    params = init_params(key_params, nb_obs, nb_neurons, nb_actions)
    padded_params = pad_params(params)

    fwd = jax.jit(functools.partial(network_forward, nb_actions=nb_actions))

    # --- Small acting-style batch (batch=2), single grid step. ---
    x_small = jax.random.normal(key_x1, (2, nb_obs), dtype=jnp.float32)
    q_small = jax.block_until_ready(fwd(x_small, padded_params))
    assert q_small.shape == (2, nb_actions)
    assert jnp.allclose(q_small, reference_forward_bf16(x_small, params),
                        atol=1e-2, rtol=1e-2)
    assert jnp.allclose(q_small, reference_forward_f32(x_small, params),
                        atol=1e-1, rtol=1e-1)

    # --- Replay-style batch exercising a multi-tile batch grid (grid = 4). ---
    x_batch = jax.random.normal(key_x2, (100, nb_obs), dtype=jnp.float32)
    q_batch = jax.block_until_ready(
        network_forward(x_batch, padded_params, nb_actions, block_batch=32))
    assert q_batch.shape == (100, nb_actions)
    assert jnp.allclose(q_batch, reference_forward_bf16(x_batch, params),
                        atol=1e-2, rtol=1e-2)
    assert jnp.allclose(q_batch, reference_forward_f32(x_batch, params),
                        atol=1e-1, rtol=1e-1)

    # act() equivalent: argmax over the (unpadded) action axis.
    _ = jnp.argmax(q_small, axis=1)

    print("KERNEL_OK")
</pallas_src>

<mosaic_0001>
module attributes {stable_mosaic.version = 11 : i64} {
  func.func @mlp_kernel(%arg0: i32, %arg1: memref<32x128xbf16, #tpu.memory_space<vmem>>, %arg2: memref<128x128xbf16, #tpu.memory_space<vmem>>, %arg3: memref<1x128xf32, #tpu.memory_space<vmem>>, %arg4: memref<128x128xbf16, #tpu.memory_space<vmem>>, %arg5: memref<1x128xf32, #tpu.memory_space<vmem>>, %arg6: memref<128x128xbf16, #tpu.memory_space<vmem>>, %arg7: memref<1x128xf32, #tpu.memory_space<vmem>>, %arg8: memref<32x128xf32, #tpu.memory_space<vmem>>) attributes {dimension_semantics = [#tpu.dimension_semantics<parallel>], iteration_bounds = array<i64: 1>, scalar_prefetch = 0 : i64, scratch_operands = 0 : i64, tpu.core_type = #tpu.core_type<tc>, window_params = [{transform_indices = @transform_0, window_bounds = array<i64: 32, 128>}, {pipeline_mode = #tpu.pipeline_mode<synchronous>, transform_indices = @transform_1, window_bounds = array<i64: 128, 128>}, {pipeline_mode = #tpu.pipeline_mode<synchronous>, transform_indices = @transform_2, window_bounds = array<i64: 1, 128>}, {pipeline_mode = #tpu.pipeline_mode<synchronous>, transform_indices = @transform_3, window_bounds = array<i64: 128, 128>}, {pipeline_mode = #tpu.pipeline_mode<synchronous>, transform_indices = @transform_4, window_bounds = array<i64: 1, 128>}, {pipeline_mode = #tpu.pipeline_mode<synchronous>, transform_indices = @transform_5, window_bounds = array<i64: 128, 128>}, {pipeline_mode = #tpu.pipeline_mode<synchronous>, transform_indices = @transform_6, window_bounds = array<i64: 1, 128>}, {transform_indices = @transform_7, window_bounds = array<i64: 32, 128>}]} {
    %c0 = arith.constant 0 : index
    %c0_0 = arith.constant 0 : index
    %0 = vector.load %arg1[%c0, %c0_0] : memref<32x128xbf16, #tpu.memory_space<vmem>>, vector<32x128xbf16>
    %c0_1 = arith.constant 0 : index
    %c0_2 = arith.constant 0 : index
    %1 = vector.load %arg2[%c0_1, %c0_2] : memref<128x128xbf16, #tpu.memory_space<vmem>>, vector<128x128xbf16>
    %cst = arith.constant dense<0.000000e+00> : vector<32x128xf32>
    %2 = tpu.matmul %0, %1, %cst {dimension_numbers = #tpu.dot_dimension_numbers<[1], [0], [0], [1], [0, 0, 1, 1], [], []>} : vector<32x128xbf16>, vector<128x128xbf16>, vector<32x128xf32> -> vector<32x128xf32>
    %c0_3 = arith.constant 0 : index
    %c0_4 = arith.constant 0 : index
    %3 = vector.load %arg3[%c0_3, %c0_4] : memref<1x128xf32, #tpu.memory_space<vmem>>, vector<1x128xf32>
    %4 = vector.broadcast %3 : vector<1x128xf32> to vector<32x128xf32>
    %5 = arith.addf %2, %4 : vector<32x128xf32>
    %cst_5 = arith.constant 0.000000e+00 : f32
    %6 = vector.broadcast %cst_5 : f32 to vector<32x128xf32>
    %7 = arith.maximumf %5, %6 : vector<32x128xf32>
    %8 = arith.truncf %7 : vector<32x128xf32> to vector<32x128xbf16>
    %c0_6 = arith.constant 0 : index
    %c0_7 = arith.constant 0 : index
    %9 = vector.load %arg4[%c0_6, %c0_7] : memref<128x128xbf16, #tpu.memory_space<vmem>>, vector<128x128xbf16>
    %cst_8 = arith.constant dense<0.000000e+00> : vector<32x128xf32>
    %10 = tpu.matmul %8, %9, %cst_8 {dimension_numbers = #tpu.dot_dimension_numbers<[1], [0], [0], [1], [0, 0, 1, 1], [], []>} : vector<32x128xbf16>, vector<128x128xbf16>, vector<32x128xf32> -> vector<32x128xf32>
    %c0_9 = arith.constant 0 : index
    %c0_10 = arith.constant 0 : index
    %11 = vector.load %arg5[%c0_9, %c0_10] : memref<1x128xf32, #tpu.memory_space<vmem>>, vector<1x128xf32>
    %12 = vector.broadcast %11 : vector<1x128xf32> to vector<32x128xf32>
    %13 = arith.addf %10, %12 : vector<32x128xf32>
    %cst_11 = arith.constant 0.000000e+00 : f32
    %14 = vector.broadcast %cst_11 : f32 to vector<32x128xf32>
    %15 = arith.maximumf %13, %14 : vector<32x128xf32>
    %16 = arith.truncf %15 : vector<32x128xf32> to vector<32x128xbf16>
    %c0_12 = arith.constant 0 : index
    %c0_13 = arith.constant 0 : index
    %17 = vector.load %arg6[%c0_12, %c0_13] : memref<128x128xbf16, #tpu.memory_space<vmem>>, vector<128x128xbf16>
    %cst_14 = arith.constant dense<0.000000e+00> : vector<32x128xf32>
    %18 = tpu.matmul %16, %17, %cst_14 {dimension_numbers = #tpu.dot_dimension_numbers<[1], [0], [0], [1], [0, 0, 1, 1], [], []>} : vector<32x128xbf16>, vector<128x128xbf16>, vector<32x128xf32> -> vector<32x128xf32>
    %c0_15 = arith.constant 0 : index
    %c0_16 = arith.constant 0 : index
    %19 = vector.load %arg7[%c0_15, %c0_16] : memref<1x128xf32, #tpu.memory_space<vmem>>, vector<1x128xf32>
    %20 = vector.broadcast %19 : vector<1x128xf32> to vector<32x128xf32>
    %21 = arith.addf %18, %20 : vector<32x128xf32>
    %c0_17 = arith.constant 0 : index
    %c0_18 = arith.constant 0 : index
    %22 = vector.load %arg8[%c0_17, %c0_18] : memref<32x128xf32, #tpu.memory_space<vmem>>, vector<32x128xf32>
    tpu.vector_store %arg8[%c0_17, %c0_18], %21 {strides = array<i32>} : memref<32x128xf32, #tpu.memory_space<vmem>>, vector<32x128xf32>,
    return
  }
  func.func @transform_0(%arg0: i32) -> (i32, i32) {
    %c0_i32 = arith.constant 0 : i32
    %c0_i32_0 = arith.constant 0 : i32
    return %arg0, %c0_i32 : i32, i32
  }
  func.func @transform_1(%arg0: i32) -> (i32, i32) {
    %c0_i32 = arith.constant 0 : i32
    %c0_i32_0 = arith.constant 0 : i32
    %c0_i32_1 = arith.constant 0 : i32
    return %c0_i32, %c0_i32_0 : i32, i32
  }
  func.func @transform_2(%arg0: i32) -> (i32, i32) {
    %c0_i32 = arith.constant 0 : i32
    %c0_i32_0 = arith.constant 0 : i32
    %c0_i32_1 = arith.constant 0 : i32
    return %c0_i32, %c0_i32_0 : i32, i32
  }
  func.func @transform_3(%arg0: i32) -> (i32, i32) {
    %c0_i32 = arith.constant 0 : i32
    %c0_i32_0 = arith.constant 0 : i32
    %c0_i32_1 = arith.constant 0 : i32
    return %c0_i32, %c0_i32_0 : i32, i32
  }
  func.func @transform_4(%arg0: i32) -> (i32, i32) {
    %c0_i32 = arith.constant 0 : i32
    %c0_i32_0 = arith.constant 0 : i32
    %c0_i32_1 = arith.constant 0 : i32
    return %c0_i32, %c0_i32_0 : i32, i32
  }
  func.func @transform_5(%arg0: i32) -> (i32, i32) {
    %c0_i32 = arith.constant 0 : i32
    %c0_i32_0 = arith.constant 0 : i32
    %c0_i32_1 = arith.constant 0 : i32
    return %c0_i32, %c0_i32_0 : i32, i32
  }
  func.func @transform_6(%arg0: i32) -> (i32, i32) {
    %c0_i32 = arith.constant 0 : i32
    %c0_i32_0 = arith.constant 0 : i32
    %c0_i32_1 = arith.constant 0 : i32
    return %c0_i32, %c0_i32_0 : i32, i32
  }
  func.func @transform_7(%arg0: i32) -> (i32, i32) {
    %c0_i32 = arith.constant 0 : i32
    %c0_i32_0 = arith.constant 0 : i32
    return %arg0, %c0_i32 : i32, i32
  }
}

</mosaic_0001>

<llo_original>
// kernel: network_forward.1
$region0: #{network_forward.1}
  #allocation0 [shape = 'u32[]', space=smem, size = 0x4, offset = 0x4, fixed_abs, tag = 'smem constant byte address 0x4 - core index']
  #allocation1 [shape = 'u32[144,128]{1,0:T(1,128)}', space=vmem, size = 0x12000, scoped, tag = 'internal scratch']
  %s0 = inlined_call_operand.vmem [shape: bf16[32,128], index: 0, kind: input, shape index: {}]
  %s1 = inlined_call_operand.hbm [shape: bf16[128,128], index: 1, kind: input, shape index: {}]
  %s2 = inlined_call_operand.vmem [shape: f32[1,128], index: 2, kind: input, shape index: {}]
  %s3 = inlined_call_operand.hbm [shape: bf16[128,128], index: 3, kind: input, shape index: {}]
  %s4 = inlined_call_operand.vmem [shape: f32[1,128], index: 4, kind: input, shape index: {}]
  %s5 = inlined_call_operand.hbm [shape: bf16[128,128], index: 5, kind: input, shape index: {}]
  %s6 = inlined_call_operand.vmem [shape: f32[1,128], index: 6, kind: input, shape index: {}]
  %s7 = inlined_call_operand.vmem [shape: f32[32,128], index: 7, kind: output, shape index: {}]
  %s8 = sld [smem:[#allocation0]]
  $region50: #{network_forward.1} parent=0
    _
  %s10 = ssub.s32 1, %s8
  %s11 = scalar_select 0, %s10, %s8
  $region1: #{network_forward.1} parent=0
    #allocation2 [shape = 'u8[32768]{0}', space=vmem, size = 0x8000, scoped, tag = 'input window, operand 1, single buffered']
    #allocation3 [shape = 's32[1]{0}', space=sflag, size = 0x4, scoped, tag = 'scoped memory for network_forward.1']
    #allocation4 [shape = 'u8[32768]{0}', space=vmem, size = 0x8000, scoped, tag = 'input window, operand 3, single buffered']
    #allocation5 [shape = 's32[1]{0}', space=sflag, size = 0x4, scoped, tag = 'scoped memory for network_forward.1']
    #allocation6 [shape = 'u8[32768]{0}', space=vmem, size = 0x8000, scoped, tag = 'input window, operand 5, single buffered']
    %12 = vsyncpa [#allocation3], 0
    %13 = vsyncpa [#allocation5], 0
    // Predicated region
    $region2: #{network_forward.1} parent=1 // pred_check
      _
    $region3: #{network_forward.1} parent=1 // pred_check_branch
      %15 = sbr.rel (0) target = $region5
    $region4: #{network_forward.1} parent=1 // pred_region
      _
    $region5: #{network_forward.1} parent=1 // pred_fallthru
      _
    // Predicated region
    $region6: #{network_forward.1} parent=1 // pred_check
      _
    $region7: #{network_forward.1} parent=1 // pred_check_branch
      %17 = sbr.rel (0) target = $region9
    $region8: #{network_forward.1} parent=1 // pred_region
      %s19 = ssub.s32 1024, 1024
      %20 = vsyncadd [#allocation3], %s19
      %s21 = sshll.u32 [#allocation2], 4
      %s22 = int_to_ptr.vmem [resolvable:$true] %s21
      %27 = dma.hbm_to_vmem [thread:$0]  %s1, 1024, %s22, [#allocation3], 64, 64, 4
    $region9: #{network_forward.1} parent=1 // pred_fallthru
      _
    // Predicated region
    $region10: #{network_forward.1} parent=1 // pred_check
      _
    $region11: #{network_forward.1} parent=1 // pred_check_branch
      %29 = sbr.rel (0) target = $region13
    $region12: #{network_forward.1} parent=1 // pred_region
      _
    $region13: #{network_forward.1} parent=1 // pred_fallthru
      _
    // Predicated region
    $region14: #{network_forward.1} parent=1 // pred_check
      _
    $region15: #{network_forward.1} parent=1 // pred_check_branch
      %31 = sbr.rel (0) target = $region17
    $region16: #{network_forward.1} parent=1 // pred_region
      %s33 = ssub.s32 1024, 1024
      %34 = vsyncadd [#allocation5], %s33
      %s35 = sshll.u32 [#allocation4], 4
      %s36 = int_to_ptr.vmem [resolvable:$true] %s35
      %41 = dma.hbm_to_vmem [thread:$0]  %s3, 1024, %s36, [#allocation5], 64, 64, 4
    $region17: #{network_forward.1} parent=1 // pred_fallthru
      _
    // Predicated region
    $region18: #{network_forward.1} parent=1 // pred_check
      _
    $region19: #{network_forward.1} parent=1 // pred_check_branch
      %43 = sbr.rel (0) target = $region21
    $region20: #{network_forward.1} parent=1 // pred_region
      _
    $region21: #{network_forward.1} parent=1 // pred_fallthru
      _
    // Predicated region
    $region22: #{network_forward.1} parent=1 // pred_check
      _
    $region23: #{network_forward.1} parent=1 // pred_check_branch
      %45 = sbr.rel (0) target = $region25
    $region24: #{network_forward.1} parent=1 // pred_region
      %s47 = ssub.s32 1024, 1024
      %48 = vsyncadd [#allocation5], %s47
      %s49 = sshll.u32 [#allocation6], 4
      %s50 = int_to_ptr.vmem [resolvable:$true] %s49
      %55 = dma.hbm_to_vmem [thread:$0]  %s5, 1024, %s50, [#allocation5], 64, 64, 4
    $region25: #{network_forward.1} parent=1 // pred_fallthru
      _
    // Predicated region
    $region26: #{network_forward.1} parent=1 // pred_check
      _
    $region27: #{network_forward.1} parent=1 // pred_check_branch
      %57 = sbr.rel (0) target = $region29
    $region28: #{network_forward.1} parent=1 // pred_region
      _
    $region29: #{network_forward.1} parent=1 // pred_fallthru
      _
    // Predicated region
    $region30: #{network_forward.1} parent=1 // pred_check
      _
    $region31: #{network_forward.1} parent=1 // pred_check_branch
      %59 = sbr.rel (0) target = $region33
    $region32: #{network_forward.1} parent=1 // pred_region
      %60 = dma.done [#allocation3], 1024
    $region33: #{network_forward.1} parent=1 // pred_fallthru
      _
    // Predicated region
    $region34: #{network_forward.1} parent=1 // pred_check
      _
    $region35: #{network_forward.1} parent=1 // pred_check_branch
      %62 = sbr.rel (0) target = $region37
    $region36: #{network_forward.1} parent=1 // pred_region
      %63 = dma.done [#allocation5], 1024
    $region37: #{network_forward.1} parent=1 // pred_fallthru
      _
    // Predicated region
    $region38: #{network_forward.1} parent=1 // pred_check
      _
    $region39: #{network_forward.1} parent=1 // pred_check_branch
      %65 = sbr.rel (0) target = $region41
    $region40: #{network_forward.1} parent=1 // pred_region
      %66 = dma.done [#allocation5], 1024
    $region41: #{network_forward.1} parent=1 // pred_fallthru
      _
    %v68 = vld [vmem:[%s0] sm:$0xf]
    %v69 = vld [vmem:[%s0 + $0x4] sm:$0xf]
    %v70 = vld [vmem:[%s0 + $0x8] sm:$0xf]
    %v71 = vld [vmem:[%s0 + $0xc] sm:$0xf]
    %v72 = vld [vmem:[#allocation2] sm:$0xf]
    %v73 = vld [vmem:[#allocation2 + $0x4] sm:$0xf]
    %v74 = vld [vmem:[#allocation2 + $0x8] sm:$0xf]
    %v75 = vld [vmem:[#allocation2 + $0xc] sm:$0xf]
    %v76 = vld [vmem:[#allocation2 + $0x10] sm:$0xf]
    %v77 = vld [vmem:[#allocation2 + $0x14] sm:$0xf]
    %v78 = vld [vmem:[#allocation2 + $0x18] sm:$0xf]
    %v79 = vld [vmem:[#allocation2 + $0x1c] sm:$0xf]
    %v80 = vld [vmem:[#allocation2 + $0x20] sm:$0xf]
    %v81 = vld [vmem:[#allocation2 + $0x24] sm:$0xf]
    %v82 = vld [vmem:[#allocation2 + $0x28] sm:$0xf]
    %v83 = vld [vmem:[#allocation2 + $0x2c] sm:$0xf]
    %v84 = vld [vmem:[#allocation2 + $0x30] sm:$0xf]
    %v85 = vld [vmem:[#allocation2 + $0x34] sm:$0xf]
    %v86 = vld [vmem:[#allocation2 + $0x38] sm:$0xf]
    %v87 = vld [vmem:[#allocation2 + $0x3c] sm:$0xf]
    %v88 = vld [vmem:[%s2] sm:$0x1]
    %v90 = vlaneseq
    %v91 = vshrl.u32 %v90, 7
    %v92 = vsub.s32 0, %v91
    %v93 = vrot.slane %v88, %v92
    %v99 = vunpack.c.l.b16 %v68
    %v100 = vunpack.c.l.b16 %v69
    %v101 = vunpack.c.l.b16 %v70
    %v102 = vunpack.c.l.b16 %v71
    %v103 = vpack.c.b16 %v100, %v99
    %v104 = vpack.c.b16 %v102, %v101
    %v123 = vunpack.c.l.b16 %v72
    %v124 = vunpack.c.l.b16 %v73
    %v125 = vunpack.c.l.b16 %v74
    %v126 = vunpack.c.l.b16 %v75
    %v127 = vunpack.c.l.b16 %v76
    %v128 = vunpack.c.l.b16 %v77
    %v129 = vunpack.c.l.b16 %v78
    %v130 = vunpack.c.l.b16 %v79
    %v131 = vunpack.c.l.b16 %v80
    %v132 = vunpack.c.l.b16 %v81
    %v133 = vunpack.c.l.b16 %v82
    %v134 = vunpack.c.l.b16 %v83
    %v135 = vunpack.c.l.b16 %v84
    %v136 = vunpack.c.l.b16 %v85
    %v137 = vunpack.c.l.b16 %v86
    %v138 = vunpack.c.l.b16 %v87
    %v139 = vpack.c.b16 %v124, %v123
    %v140 = vpack.c.b16 %v126, %v125
    %v141 = vpack.c.b16 %v128, %v127
    %v142 = vpack.c.b16 %v130, %v129
    %v143 = vpack.c.b16 %v132, %v131
    %v144 = vpack.c.b16 %v134, %v133
    %v145 = vpack.c.b16 %v136, %v135
    %v146 = vpack.c.b16 %v138, %v137
    %155 = vmatprep.subr.bf16.mxu0 0
    %156 = vmatpush1.bf16.msra.mxu0 %v139
    %157 = vmatprep.subr.bf16.mxu0 0
    %158 = vmatpush1.bf16.msra.mxu0 %v140
    %159 = vmatprep.subr.bf16.mxu0 0
    %160 = vmatpush1.bf16.msra.mxu0 %v141
    %161 = vmatprep.subr.bf16.mxu0 0
    %162 = vmatpush1.bf16.msra.mxu0 %v142
    %163 = vmatprep.subr.bf16.mxu0 0
    %164 = vmatpush1.bf16.msra.mxu0 %v143
    %165 = vmatprep.subr.bf16.mxu0 0
    %166 = vmatpush1.bf16.msra.mxu0 %v144
    %167 = vmatprep.subr.bf16.mxu0 0
    %168 = vmatpush1.bf16.msra.mxu0 %v145
    %169 = vmatprep.subr.bf16.mxu0 0
    %170 = vmatpush1.bf16.msra.mxu0 %v146
    %171 = vmatprep.subr.bf16.mxu0 0
    %172 = vmatpush1.bf16.msra.mxu0 0
    %173 = vmatprep.subr.bf16.mxu0 0
    %174 = vmatpush1.bf16.msra.mxu0 0
    %175 = vmatprep.subr.bf16.mxu0 0
    %176 = vmatpush1.bf16.msra.mxu0 0
    %177 = vmatprep.subr.bf16.mxu0 0
    %178 = vmatpush1.bf16.msra.mxu0 0
    %179 = vmatprep.subr.bf16.mxu0 0
    %180 = vmatpush1.bf16.msra.mxu0 0
    %181 = vmatprep.subr.bf16.mxu0 0
    %182 = vmatpush1.bf16.msra.mxu0 0
    %183 = vmatprep.subr.bf16.mxu0 0
    %184 = vmatpush1.bf16.msra.mxu0 0
    %185 = vmatprep.subr.bf16.mxu0 0
    %186 = vmatpush1.bf16.msra.mxu0 0
    %187 = vmatprep.mubr.bf16.mxu0 0
    %188 = vmatmul.mubr.bf16.gmra.mrb[0].mxu0 %v103
    %v189 = vpop.f32.mrb[0].mxu0
    %v190 = vadd.f32 %v93, %v189
    %v191 = vpop.f32.mrb[0].mxu0
    %v192 = vpop.f32.mrb[0].mxu0
    %v193 = vadd.f32 %v93, %v192
    %v194 = vpop.f32.mrb[0].mxu0
    %195 = vmatprep.mubr.bf16.mxu0 0
    %196 = vmatmul.mubr.bf16.gmra.mrb[0].mxu0 %v104
    %v197 = vpop.f32.mrb[0].mxu0
    %v198 = vadd.f32 %v93, %v197
    %v199 = vpop.f32.mrb[0].mxu0
    %v200 = vpop.f32.mrb[0].mxu0
    %v201 = vadd.f32 %v93, %v200
    %v202 = vpop.f32.mrb[0].mxu0
    %203 = vdwg.mxu0
    %v204 = vmax.f32 %v190, 0.0
    %v205 = vmax.f32 %v193, 0.0
    %v206 = vmax.f32 %v198, 0.0
    %v207 = vmax.f32 %v201, 0.0
    %v208 = vpack.c.bf16 %v205, %v204
    %v209 = vpack.c.bf16 %v207, %v206
    %v210 = vld [vmem:[#allocation4] sm:$0xf]
    %v211 = vld [vmem:[#allocation4 + $0x4] sm:$0xf]
    %v212 = vld [vmem:[#allocation4 + $0x8] sm:$0xf]
    %v213 = vld [vmem:[#allocation4 + $0xc] sm:$0xf]
    %v214 = vld [vmem:[#allocation4 + $0x10] sm:$0xf]
    %v215 = vld [vmem:[#allocation4 + $0x14] sm:$0xf]
    %v216 = vld [vmem:[#allocation4 + $0x18] sm:$0xf]
    %v217 = vld [vmem:[#allocation4 + $0x1c] sm:$0xf]
    %v218 = vld [vmem:[#allocation4 + $0x20] sm:$0xf]
    %v219 = vld [vmem:[#allocation4 + $0x24] sm:$0xf]
    %v220 = vld [vmem:[#allocation4 + $0x28] sm:$0xf]
    %v221 = vld [vmem:[#allocation4 + $0x2c] sm:$0xf]
    %v222 = vld [vmem:[#allocation4 + $0x30] sm:$0xf]
    %v223 = vld [vmem:[#allocation4 + $0x34] sm:$0xf]
    %v224 = vld [vmem:[#allocation4 + $0x38] sm:$0xf]
    %v225 = vld [vmem:[#allocation4 + $0x3c] sm:$0xf]
    %v226 = vld [vmem:[%s4] sm:$0x1]
    %v228 = vlaneseq
    %v229 = vshrl.u32 %v228, 7
    %v230 = vsub.s32 0, %v229
    %v231 = vrot.slane %v226, %v230
    %v249 = vunpack.c.l.b16 %v210
    %v250 = vunpack.c.l.b16 %v211
    %v251 = vunpack.c.l.b16 %v212
    %v252 = vunpack.c.l.b16 %v213
    %v253 = vunpack.c.l.b16 %v214
    %v254 = vunpack.c.l.b16 %v215
    %v255 = vunpack.c.l.b16 %v216
    %v256 = vunpack.c.l.b16 %v217
    %v257 = vunpack.c.l.b16 %v218
    %v258 = vunpack.c.l.b16 %v219
    %v259 = vunpack.c.l.b16 %v220
    %v260 = vunpack.c.l.b16 %v221
    %v261 = vunpack.c.l.b16 %v222
    %v262 = vunpack.c.l.b16 %v223
    %v263 = vunpack.c.l.b16 %v224
    %v264 = vunpack.c.l.b16 %v225
    %v265 = vpack.c.b16 %v250, %v249
    %v266 = vpack.c.b16 %v252, %v251
    %v267 = vpack.c.b16 %v254, %v253
    %v268 = vpack.c.b16 %v256, %v255
    %v269 = vpack.c.b16 %v258, %v257
    %v270 = vpack.c.b16 %v260, %v259
    %v271 = vpack.c.b16 %v262, %v261
    %v272 = vpack.c.b16 %v264, %v263
    %281 = vmatprep.subr.bf16.mxu0 0
    %282 = vmatpush1.bf16.msra.mxu0 %v265
    %283 = vmatprep.subr.bf16.mxu0 0
    %284 = vmatpush1.bf16.msra.mxu0 %v266
    %285 = vmatprep.subr.bf16.mxu0 0
    %286 = vmatpush1.bf16.msra.mxu0 %v267
    %287 = vmatprep.subr.bf16.mxu0 0
    %288 = vmatpush1.bf16.msra.mxu0 %v268
    %289 = vmatprep.subr.bf16.mxu0 0
    %290 = vmatpush1.bf16.msra.mxu0 %v269
    %291 = vmatprep.subr.bf16.mxu0 0
    %292 = vmatpush1.bf16.msra.mxu0 %v270
    %293 = vmatprep.subr.bf16.mxu0 0
    %294 = vmatpush1.bf16.msra.mxu0 %v271
    %295 = vmatprep.subr.bf16.mxu0 0
    %296 = vmatpush1.bf16.msra.mxu0 %v272
    %297 = vmatprep.subr.bf16.mxu0 0
    %298 = vmatpush1.bf16.msra.mxu0 0
    %299 = vmatprep.subr.bf16.mxu0 0
    %300 = vmatpush1.bf16.msra.mxu0 0
    %301 = vmatprep.subr.bf16.mxu0 0
    %302 = vmatpush1.bf16.msra.mxu0 0
    %303 = vmatprep.subr.bf16.mxu0 0
    %304 = vmatpush1.bf16.msra.mxu0 0
    %305 = vmatprep.subr.bf16.mxu0 0
    %306 = vmatpush1.bf16.msra.mxu0 0
    %307 = vmatprep.subr.bf16.mxu0 0
    %308 = vmatpush1.bf16.msra.mxu0 0
    %309 = vmatprep.subr.bf16.mxu0 0
    %310 = vmatpush1.bf16.msra.mxu0 0
    %311 = vmatprep.subr.bf16.mxu0 0
    %312 = vmatpush1.bf16.msra.mxu0 0
    %313 = vmatprep.mubr.bf16.mxu0 0
    %314 = vmatmul.mubr.bf16.gmra.mrb[0].mxu0 %v208
    %v315 = vpop.f32.mrb[0].mxu0
    %v316 = vadd.f32 %v231, %v315
    %v317 = vpop.f32.mrb[0].mxu0
    %v318 = vpop.f32.mrb[0].mxu0
    %v319 = vadd.f32 %v231, %v318
    %v320 = vpop.f32.mrb[0].mxu0
    %321 = vmatprep.mubr.bf16.mxu0 0
    %322 = vmatmul.mubr.bf16.gmra.mrb[0].mxu0 %v209
    %v323 = vpop.f32.mrb[0].mxu0
    %v324 = vadd.f32 %v231, %v323
    %v325 = vpop.f32.mrb[0].mxu0
    %v326 = vpop.f32.mrb[0].mxu0
    %v327 = vadd.f32 %v231, %v326
    %v328 = vpop.f32.mrb[0].mxu0
    %329 = vdwg.mxu0
    %v330 = vmax.f32 %v316, 0.0
    %v331 = vmax.f32 %v319, 0.0
    %v332 = vmax.f32 %v324, 0.0
    %v333 = vmax.f32 %v327, 0.0
    %v334 = vpack.c.bf16 %v331, %v330
    %v335 = vpack.c.bf16 %v333, %v332
    %v336 = vld [vmem:[#allocation6] sm:$0xf]
    %v337 = vld [vmem:[#allocation6 + $0x4] sm:$0xf]
    %v338 = vld [vmem:[#allocation6 + $0x8] sm:$0xf]
    %v339 = vld [vmem:[#allocation6 + $0xc] sm:$0xf]
    %v340 = vld [vmem:[#allocation6 + $0x10] sm:$0xf]
    %v341 = vld [vmem:[#allocation6 + $0x14] sm:$0xf]
    %v342 = vld [vmem:[#allocation6 + $0x18] sm:$0xf]
    %v343 = vld [vmem:[#allocation6 + $0x1c] sm:$0xf]
    %v344 = vld [vmem:[#allocation6 + $0x20] sm:$0xf]
    %v345 = vld [vmem:[#allocation6 + $0x24] sm:$0xf]
    %v346 = vld [vmem:[#allocation6 + $0x28] sm:$0xf]
    %v347 = vld [vmem:[#allocation6 + $0x2c] sm:$0xf]
    %v348 = vld [vmem:[#allocation6 + $0x30] sm:$0xf]
    %v349 = vld [vmem:[#allocation6 + $0x34] sm:$0xf]
    %v350 = vld [vmem:[#allocation6 + $0x38] sm:$0xf]
    %v351 = vld [vmem:[#allocation6 + $0x3c] sm:$0xf]
    %v352 = vld [vmem:[%s6] sm:$0x1]
    %v354 = vlaneseq
    %v355 = vshrl.u32 %v354, 7
    %v356 = vsub.s32 0, %v355
    %v357 = vrot.slane %v352, %v356
    %v375 = vunpack.c.l.b16 %v336
    %v376 = vunpack.c.l.b16 %v337
    %v377 = vunpack.c.l.b16 %v338
    %v378 = vunpack.c.l.b16 %v339
    %v379 = vunpack.c.l.b16 %v340
    %v380 = vunpack.c.l.b16 %v341
    %v381 = vunpack.c.l.b16 %v342
    %v382 = vunpack.c.l.b16 %v343
    %v383 = vunpack.c.l.b16 %v344
    %v384 = vunpack.c.l.b16 %v345
    %v385 = vunpack.c.l.b16 %v346
    %v386 = vunpack.c.l.b16 %v347
    %v387 = vunpack.c.l.b16 %v348
    %v388 = vunpack.c.l.b16 %v349
    %v389 = vunpack.c.l.b16 %v350
    %v390 = vunpack.c.l.b16 %v351
    %v391 = vpack.c.b16 %v376, %v375
    %v392 = vpack.c.b16 %v378, %v377
    %v393 = vpack.c.b16 %v380, %v379
    %v394 = vpack.c.b16 %v382, %v381
    %v395 = vpack.c.b16 %v384, %v383
    %v396 = vpack.c.b16 %v386, %v385
    %v397 = vpack.c.b16 %v388, %v387
    %v398 = vpack.c.b16 %v390, %v389
    %407 = vmatprep.subr.bf16.mxu0 0
    %408 = vmatpush1.bf16.msra.mxu0 %v391
    %409 = vmatprep.subr.bf16.mxu0 0
    %410 = vmatpush1.bf16.msra.mxu0 %v392
    %411 = vmatprep.subr.bf16.mxu0 0
    %412 = vmatpush1.bf16.msra.mxu0 %v393
    %413 = vmatprep.subr.bf16.mxu0 0
    %414 = vmatpush1.bf16.msra.mxu0 %v394
    %415 = vmatprep.subr.bf16.mxu0 0
    %416 = vmatpush1.bf16.msra.mxu0 %v395
    %417 = vmatprep.subr.bf16.mxu0 0
    %418 = vmatpush1.bf16.msra.mxu0 %v396
    %419 = vmatprep.subr.bf16.mxu0 0
    %420 = vmatpush1.bf16.msra.mxu0 %v397
    %421 = vmatprep.subr.bf16.mxu0 0
    %422 = vmatpush1.bf16.msra.mxu0 %v398
    %423 = vmatprep.subr.bf16.mxu0 0
    %424 = vmatpush1.bf16.msra.mxu0 0
    %425 = vmatprep.subr.bf16.mxu0 0
    %426 = vmatpush1.bf16.msra.mxu0 0
    %427 = vmatprep.subr.bf16.mxu0 0
    %428 = vmatpush1.bf16.msra.mxu0 0
    %429 = vmatprep.subr.bf16.mxu0 0
    %430 = vmatpush1.bf16.msra.mxu0 0
    %431 = vmatprep.subr.bf16.mxu0 0
    %432 = vmatpush1.bf16.msra.mxu0 0
    %433 = vmatprep.subr.bf16.mxu0 0
    %434 = vmatpush1.bf16.msra.mxu0 0
    %435 = vmatprep.subr.bf16.mxu0 0
    %436 = vmatpush1.bf16.msra.mxu0 0
    %437 = vmatprep.subr.bf16.mxu0 0
    %438 = vmatpush1.bf16.msra.mxu0 0
    %439 = vmatprep.mubr.bf16.mxu0 0
    %440 = vmatmul.mubr.bf16.gmra.mrb[0].mxu0 %v334
    %v441 = vpop.f32.mrb[0].mxu0
    %v442 = vadd.f32 %v357, %v441
    %v443 = vpop.f32.mrb[0].mxu0
    %v444 = vpop.f32.mrb[0].mxu0
    %v445 = vadd.f32 %v357, %v444
    %v446 = vpop.f32.mrb[0].mxu0
    %447 = vmatprep.mubr.bf16.mxu0 0
    %448 = vmatmul.mubr.bf16.gmra.mrb[0].mxu0 %v335
    %v449 = vpop.f32.mrb[0].mxu0
    %v450 = vadd.f32 %v357, %v449
    %v451 = vpop.f32.mrb[0].mxu0
    %v452 = vpop.f32.mrb[0].mxu0
    %v453 = vadd.f32 %v357, %v452
    %v454 = vpop.f32.mrb[0].mxu0
    %455 = vdwg.mxu0
    %456 = vst [vmem:[%s7] sm:$0xff] %v442
    %457 = vst [vmem:[%s7 + $0x8] sm:$0xff] %v445
    %458 = vst [vmem:[%s7 + $0x10] sm:$0xff] %v450
    %459 = vst [vmem:[%s7 + $0x18] sm:$0xff] %v453
    // Predicated region
    $region42: #{network_forward.1} parent=1 // pred_check
      _
    $region43: #{network_forward.1} parent=1 // pred_check_branch
      %461 = sbr.rel (0) target = $region45
    $region44: #{network_forward.1} parent=1 // pred_region
      _
    $region45: #{network_forward.1} parent=1 // pred_fallthru
      _
    // Predicated region
    $region46: #{network_forward.1} parent=1 // pred_check
      _
    $region47: #{network_forward.1} parent=1 // pred_check_branch
      %463 = sbr.rel (0) target = $region49
    $region48: #{network_forward.1} parent=1 // pred_region
      _
    $region49: #{network_forward.1} parent=1 // pred_fallthru
      _
    %464 = vsyncpa [#allocation3], 1
    %465 = vsyncpa [#allocation5], 1

</llo_original>
